<compile_context>
chip_gen: v5e
topology: v5e:2x2
jax: 0.10.0
libtpu: 0.0.40
codegen_flags: <defaults>
</compile_context>

<pallas_src>
import functools

import jax
import jax.numpy as jnp
import numpy as np
from jax.experimental import pallas as pl
from jax.experimental.pallas import tpu as pltpu

LEAKY_SLOPE = 0.01     # torch.nn.LeakyReLU default negative_slope
BN_EPS = 1e-5          # torch.nn.BatchNorm1d default eps


def _round_up(v, m):
    return (v + m - 1) // m * m


# --------------------------------------------------------------------------
# Fused encoder kernel: (Linear -> BN(train) -> LeakyReLU) * n_hidden -> Linear
# Param slab layout (all rows are W=lane-padded wide, offsets multiples of 8):
#   per hidden layer i : [ W rows  : weight_i (zero-padded (W, W)) ]
#                        [ 8 rows  : row0 = gamma_i, row1 = beta_i ]
#   final layer        : [ W rows  : w_final (zero-padded (W, W))  ]
#                        [ 8 rows  : row0 = b_final                ]
# --------------------------------------------------------------------------
def _encoder_kernel(n_hidden, width, x_ref, p_ref, out_ref):
    h = x_ref[...]                                           # (B, W) f32
    row = 0
    for _ in range(n_hidden):
        w = p_ref[row:row + width, :]                        # (W, W)
        row += width
        gb = p_ref[row:row + 8, :]                           # (8, W)
        row += 8
        gamma = gb[0:1, :]
        beta = gb[1:2, :]

        # Linear (bias elided: cancels exactly in train-mode BN), f32 on MXU.
        h = jnp.dot(h, w, preferred_element_type=jnp.float32)

        # BatchNorm1d (training mode) with fused affine.
        mean = jnp.mean(h, axis=0, keepdims=True)
        var = jnp.mean((h - mean) ** 2, axis=0, keepdims=True)
        scale = gamma * jax.lax.rsqrt(var + BN_EPS)
        shift = beta - mean * scale
        h = h * scale + shift

        # LeakyReLU.
        h = jnp.maximum(h, LEAKY_SLOPE * h)

    w_f = p_ref[row:row + width, :]                          # (W, W)
    row += width
    b_f = p_ref[row:row + 1, :]                              # (1, W)
    out_ref[...] = jnp.dot(h, w_f, preferred_element_type=jnp.float32) + b_f


# --------------------------------------------------------------------------
# Host-side parameter packing into one lane-padded slab (done once, not jitted)
# --------------------------------------------------------------------------
def pack_params(params, input_size, latent_size):
    hidden, (w_f, b_f) = params
    widths = [input_size] + [w.shape[1] for (w, _, _, _) in hidden] + [2 * latent_size]
    width = _round_up(max(widths), 128)

    chunks = []
    for (w, _b, gamma, beta) in hidden:       # linear bias dropped (exact under BN train)
        wp = np.zeros((width, width), np.float32)
        wp[: w.shape[0], : w.shape[1]] = np.asarray(w)
        gb = np.zeros((8, width), np.float32)
        gb[0, : gamma.shape[0]] = np.asarray(gamma)
        gb[1, : beta.shape[0]] = np.asarray(beta)
        chunks += [wp, gb]

    wfp = np.zeros((width, width), np.float32)
    wfp[: w_f.shape[0], : w_f.shape[1]] = np.asarray(w_f)
    bfp = np.zeros((8, width), np.float32)
    bfp[0, : b_f.shape[0]] = np.asarray(b_f)
    chunks += [wfp, bfp]

    slab = jnp.asarray(np.concatenate(chunks, axis=0))       # (rows, width)
    return slab, width


# --------------------------------------------------------------------------
# Forward wrapper
# --------------------------------------------------------------------------
@functools.partial(jax.jit, static_argnames=("n_hidden", "width", "latent_size"))
def vae_encoder_forward(vector, slab, *, n_hidden, width, latent_size):
    B, in_features = vector.shape
    # Lane-dense input block (layout plumbing only).
    x = jnp.pad(vector.astype(jnp.float32), ((0, 0), (0, width - in_features)))

    vmem = pl.BlockSpec(memory_space=pltpu.MemorySpace.VMEM)
    flops = 2 * B * width * width * (n_hidden + 1)
    bytes_accessed = 4 * (x.size + slab.size + B * width)

    encoded = pl.pallas_call(
        functools.partial(_encoder_kernel, n_hidden, width),
        out_shape=jax.ShapeDtypeStruct((B, width), jnp.float32),
        in_specs=[vmem, vmem],
        out_specs=vmem,
        cost_estimate=pl.CostEstimate(
            flops=flops,
            transcendentals=n_hidden * width,
            bytes_accessed=bytes_accessed,
        ),
        compiler_params=pltpu.CompilerParams(vmem_limit_bytes=32 * 1024 * 1024),
    )(x, slab)

    mu = encoded[:, :latent_size]
    log_sigma = encoded[:, latent_size:2 * latent_size]
    return mu, log_sigma


# --------------------------------------------------------------------------
# Parameter construction (shapes follow the PyTorch __init__)
# --------------------------------------------------------------------------
def make_params(key, input_size, latent_size, down_channels):
    x = (input_size // (2 * latent_size)) ** (1.0 / down_channels)
    hidden = []
    in_features = input_size
    k = key
    for _ in range(down_channels - 1):
        out_features = int(in_features // x)
        k, kw, kb, kg, kbe = jax.random.split(k, 5)
        w = 0.1 * jax.random.normal(kw, (in_features, out_features), jnp.float32)
        b = 0.1 * jax.random.normal(kb, (out_features,), jnp.float32)
        gamma = 1.0 + 0.1 * jax.random.normal(kg, (out_features,), jnp.float32)
        beta = 0.1 * jax.random.normal(kbe, (out_features,), jnp.float32)
        hidden.append((w, b, gamma, beta))
        in_features = out_features
    k, kw, kb = jax.random.split(k, 3)
    w_f = 0.1 * jax.random.normal(kw, (in_features, 2 * latent_size), jnp.float32)
    b_f = 0.1 * jax.random.normal(kb, (2 * latent_size,), jnp.float32)
    return hidden, (w_f, b_f)


# --------------------------------------------------------------------------
# Pure-JAX reference (mirrors the PyTorch forward, training-mode BatchNorm,
# including the hidden-layer Linear biases that the kernel elides).
# --------------------------------------------------------------------------
def reference_forward(vector, params, latent_size):
    hidden, (w_f, b_f) = params
    h = vector
    for (w, b, gamma, beta) in hidden:
        h = h @ w + b
        mean = jnp.mean(h, axis=0, keepdims=True)
        var = jnp.mean((h - mean) ** 2, axis=0, keepdims=True)
        h = (h - mean) * jax.lax.rsqrt(var + BN_EPS) * gamma + beta
        h = jnp.where(h > 0, h, LEAKY_SLOPE * h)
    enc = h @ w_f + b_f
    return enc[:, :latent_size], enc[:, latent_size:]


# --------------------------------------------------------------------------
# Demo / correctness check
# --------------------------------------------------------------------------
if __name__ == "__main__":
    configs = [
        # (input_size, latent_size, down_channels, batch)
        (64, 10, 2, 8),
        (96, 8, 3, 16),
    ]

    key = jax.random.PRNGKey(0)
    for cfg_idx, (input_size, latent_size, down_channels, B) in enumerate(configs):
        kp, kx = jax.random.split(jax.random.fold_in(key, cfg_idx))
        params = make_params(kp, input_size, latent_size, down_channels)
        slab, width = pack_params(params, input_size, latent_size)
        vector = jax.random.normal(kx, (B, input_size), jnp.float32)

        mu, log_sigma = vae_encoder_forward(
            vector, slab,
            n_hidden=down_channels - 1, width=width, latent_size=latent_size)
        jax.block_until_ready((mu, log_sigma))

        mu_ref, ls_ref = reference_forward(vector, params, latent_size)
        np.testing.assert_allclose(np.asarray(mu), np.asarray(mu_ref),
                                   rtol=1e-2, atol=1e-2)
        np.testing.assert_allclose(np.asarray(log_sigma), np.asarray(ls_ref),
                                   rtol=1e-2, atol=1e-2)

    print("KERNEL_OK")
</pallas_src>

<mosaic_0001>
module attributes {stable_mosaic.version = 11 : i64} {
  func.func @_encoder_kernel(%arg0: memref<8x128xf32, #tpu.memory_space<vmem>>, %arg1: memref<272x128xf32, #tpu.memory_space<vmem>>, %arg2: memref<8x128xf32, #tpu.memory_space<vmem>>) attributes {dimension_semantics = [], scalar_prefetch = 0 : i64, scratch_operands = 0 : i64, tpu.core_type = #tpu.core_type<tc>} {
    %c0 = arith.constant 0 : index
    %c0_0 = arith.constant 0 : index
    %0 = vector.load %arg0[%c0, %c0_0] : memref<8x128xf32, #tpu.memory_space<vmem>>, vector<8x128xf32>
    %c0_1 = arith.constant 0 : index
    %c0_2 = arith.constant 0 : index
    %1 = vector.load %arg1[%c0_1, %c0_2] : memref<272x128xf32, #tpu.memory_space<vmem>>, vector<128x128xf32>
    %c128 = arith.constant 128 : index
    %c0_3 = arith.constant 0 : index
    %2 = vector.load %arg1[%c128, %c0_3] : memref<272x128xf32, #tpu.memory_space<vmem>>, vector<8x128xf32>
    %3 = vector.extract_strided_slice %2 {offsets = [0, 0], sizes = [1, 128], strides = [1, 1]} : vector<8x128xf32> to vector<1x128xf32>
    %4 = vector.extract_strided_slice %2 {offsets = [1, 0], sizes = [1, 128], strides = [1, 1]} : vector<8x128xf32> to vector<1x128xf32>
    %cst = arith.constant dense<0.000000e+00> : vector<8x128xf32>
    %5 = tpu.matmul %0, %1, %cst {dimension_numbers = #tpu.dot_dimension_numbers<[1], [0], [0], [1], [0, 0, 1, 1], [], []>} : vector<8x128xf32>, vector<128x128xf32>, vector<8x128xf32> -> vector<8x128xf32>
    %cst_4 = arith.constant dense<0.000000e+00> : vector<128xf32>
    %6 = vector.multi_reduction <add>, %5, %cst_4 [0] : vector<8x128xf32> to vector<128xf32>
    %7 = vector.shape_cast %6 : vector<128xf32> to vector<1x128xf32>
    %cst_5 = arith.constant 8.000000e+00 : f32
    %8 = vector.broadcast %cst_5 : f32 to vector<1x128xf32>
    %9 = arith.divf %7, %8 : vector<1x128xf32>
    %10 = vector.broadcast %9 : vector<1x128xf32> to vector<8x128xf32>
    %11 = arith.subf %5, %10 : vector<8x128xf32>
    %12 = arith.mulf %11, %11 : vector<8x128xf32>
    %cst_6 = arith.constant dense<0.000000e+00> : vector<128xf32>
    %13 = vector.multi_reduction <add>, %12, %cst_6 [0] : vector<8x128xf32> to vector<128xf32>
    %14 = vector.shape_cast %13 : vector<128xf32> to vector<1x128xf32>
    %cst_7 = arith.constant 8.000000e+00 : f32
    %15 = vector.broadcast %cst_7 : f32 to vector<1x128xf32>
    %16 = arith.divf %14, %15 : vector<1x128xf32>
    %cst_8 = arith.constant 9.99999974E-6 : f32
    %17 = vector.broadcast %cst_8 : f32 to vector<1x128xf32>
    %18 = arith.addf %16, %17 : vector<1x128xf32>
    %19 = math.rsqrt %18 : vector<1x128xf32>
    %20 = arith.mulf %3, %19 : vector<1x128xf32>
    %21 = arith.mulf %9, %20 : vector<1x128xf32>
    %22 = arith.subf %4, %21 : vector<1x128xf32>
    %23 = vector.broadcast %20 : vector<1x128xf32> to vector<8x128xf32>
    %24 = arith.mulf %5, %23 : vector<8x128xf32>
    %25 = vector.broadcast %22 : vector<1x128xf32> to vector<8x128xf32>
    %26 = arith.addf %24, %25 : vector<8x128xf32>
    %cst_9 = arith.constant 0.00999999977 : f32
    %27 = vector.broadcast %cst_9 : f32 to vector<8x128xf32>
    %28 = arith.mulf %27, %26 : vector<8x128xf32>
    %29 = arith.maximumf %26, %28 : vector<8x128xf32>
    %c136 = arith.constant 136 : index
    %c0_10 = arith.constant 0 : index
    %30 = vector.load %arg1[%c136, %c0_10] : memref<272x128xf32, #tpu.memory_space<vmem>>, vector<128x128xf32>
    %c264 = arith.constant 264 : index
    %c0_11 = arith.constant 0 : index
    %31 = vector.load %arg1[%c264, %c0_11] : memref<272x128xf32, #tpu.memory_space<vmem>>, vector<1x128xf32>
    %cst_12 = arith.constant dense<0.000000e+00> : vector<8x128xf32>
    %32 = tpu.matmul %29, %30, %cst_12 {dimension_numbers = #tpu.dot_dimension_numbers<[1], [0], [0], [1], [0, 0, 1, 1], [], []>} : vector<8x128xf32>, vector<128x128xf32>, vector<8x128xf32> -> vector<8x128xf32>
    %33 = vector.broadcast %31 : vector<1x128xf32> to vector<8x128xf32>
    %34 = arith.addf %32, %33 : vector<8x128xf32>
    %c0_13 = arith.constant 0 : index
    %c0_14 = arith.constant 0 : index
    %35 = vector.load %arg2[%c0_13, %c0_14] : memref<8x128xf32, #tpu.memory_space<vmem>>, vector<8x128xf32>
    tpu.vector_store %arg2[%c0_13, %c0_14], %34 {strides = array<i32>} : memref<8x128xf32, #tpu.memory_space<vmem>>, vector<8x128xf32>,
    return
  }
}

</mosaic_0001>

<llo_original>
// kernel: vae_encoder_forward.1
$region0: #{vae_encoder_forward.1}
  #allocation0 [shape = 'u32[]', space=smem, size = 0x4, offset = 0x4, fixed_abs, tag = 'smem constant byte address 0x4 - core index']
  #allocation1 [shape = 'u32[72,128]{1,0:T(1,128)}', space=vmem, size = 0x9000, scoped, tag = 'internal scratch']
  %s0 = inlined_call_operand.vmem [shape: f32[8,128], index: 0, kind: input, shape index: {}]
  %s1 = inlined_call_operand.hbm [shape: f32[272,128], index: 1, kind: input, shape index: {}]
  %s2 = inlined_call_operand.vmem [shape: f32[8,128], index: 2, kind: output, shape index: {}]
  %s3 = sld [smem:[#allocation0]]
  $region22: #{vae_encoder_forward.1} parent=0
    _
  %s5 = ssub.s32 1, %s3
  %s6 = scalar_select 0, %s5, %s3
  $region1: #{vae_encoder_forward.1} parent=0
    #allocation2 [shape = 'u8[139264]{0}', space=vmem, size = 0x22000, scoped, tag = 'input window, operand 1, single buffered']
    #allocation3 [shape = 's32[1]{0}', space=sflag, size = 0x4, scoped, tag = 'scoped memory for vae_encoder_forward.1']
    %7 = vsyncpa [#allocation3], 0
    // Predicated region
    $region2: #{vae_encoder_forward.1} parent=1 // pred_check
      _
    $region3: #{vae_encoder_forward.1} parent=1 // pred_check_branch
      %9 = sbr.rel (0) target = $region5
    $region4: #{vae_encoder_forward.1} parent=1 // pred_region
      _
    $region5: #{vae_encoder_forward.1} parent=1 // pred_fallthru
      _
    // Predicated region
    $region6: #{vae_encoder_forward.1} parent=1 // pred_check
      _
    $region7: #{vae_encoder_forward.1} parent=1 // pred_check_branch
      %11 = sbr.rel (0) target = $region9
    $region8: #{vae_encoder_forward.1} parent=1 // pred_region
      %13 = vsyncadd [#allocation3], 0
      %s14 = sshll.u32 %s1, 4
      %s15 = int_to_ptr.hbm [resolvable:$true] %s14
      %s16 = sshll.u32 [#allocation2], 4
      %s17 = int_to_ptr.vmem [resolvable:$true] %s16
      %22 = dma.hbm_to_vmem [thread:$0]  %s15, 4352, %s17, [#allocation3], 128, 128, 8
    $region9: #{vae_encoder_forward.1} parent=1 // pred_fallthru
      _
    // Predicated region
    $region10: #{vae_encoder_forward.1} parent=1 // pred_check
      _
    $region11: #{vae_encoder_forward.1} parent=1 // pred_check_branch
      %24 = sbr.rel (0) target = $region13
    $region12: #{vae_encoder_forward.1} parent=1 // pred_region
      %26 = dma.done [#allocation3], 4352
    $region13: #{vae_encoder_forward.1} parent=1 // pred_fallthru
      _
    %v27 = vld [vmem:[%s0] sm:$0xff]
    %v28 = vld [vmem:[#allocation2] sm:$0xff]
    %v29 = vld [vmem:[#allocation2 + $0x8] sm:$0xff]
    %v30 = vld [vmem:[#allocation2 + $0x10] sm:$0xff]
    %v31 = vld [vmem:[#allocation2 + $0x18] sm:$0xff]
    %v32 = vld [vmem:[#allocation2 + $0x20] sm:$0xff]
    %v33 = vld [vmem:[#allocation2 + $0x28] sm:$0xff]
    %v34 = vld [vmem:[#allocation2 + $0x30] sm:$0xff]
    %v35 = vld [vmem:[#allocation2 + $0x38] sm:$0xff]
    %v36 = vld [vmem:[#allocation2 + $0x40] sm:$0xff]
    %v37 = vld [vmem:[#allocation2 + $0x48] sm:$0xff]
    %v38 = vld [vmem:[#allocation2 + $0x50] sm:$0xff]
    %v39 = vld [vmem:[#allocation2 + $0x58] sm:$0xff]
    %v40 = vld [vmem:[#allocation2 + $0x60] sm:$0xff]
    %v41 = vld [vmem:[#allocation2 + $0x68] sm:$0xff]
    %v42 = vld [vmem:[#allocation2 + $0x70] sm:$0xff]
    %v43 = vld [vmem:[#allocation2 + $0x78] sm:$0xff]
    %v44 = vld [vmem:[#allocation2 + $0x80] sm:$0xff]
    %45 = vmatpush.msra.mxu0 %v43
    %46 = vmatpush.msra.mxu0 %v42
    %47 = vmatpush.msra.mxu0 %v41
    %48 = vmatpush.msra.mxu0 %v40
    %49 = vmatpush.msra.mxu0 %v39
    %50 = vmatpush.msra.mxu0 %v38
    %51 = vmatpush.msra.mxu0 %v37
    %52 = vmatpush.msra.mxu0 %v36
    %53 = vmatpush.msra.mxu0 %v35
    %54 = vmatpush.msra.mxu0 %v34
    %55 = vmatpush.msra.mxu0 %v33
    %56 = vmatpush.msra.mxu0 %v32
    %57 = vmatpush.msra.mxu0 %v31
    %58 = vmatpush.msra.mxu0 %v30
    %59 = vmatpush.msra.mxu0 %v29
    %60 = vmatpush.msra.mxu0 %v28
    %61 = vmatmul.f32.gmra.mxu0 %v27
    %v62 = vpop.f32.mrf.mxu0
    %v63 = vadd.f32 0.0, %v62
    %64 = vdwg.mxu0
    %v65 = vrot.slane %v63, 4
    %v66 = vadd.f32 %v63, %v65
    %v67 = vrot.slane %v66, 2
    %v68 = vadd.f32 %v66, %v67
    %v69 = vrot.slane %v68, 1
    %v70 = vadd.f32 %v68, %v69
    %v71 = vrcp.pop 8.0
    %v72 = vmul.f32 8.0, %v71
    %v73 = vsub.f32 1.0, %v72
    %v74 = vmul.f32 %v71, %v73
    %v75 = vadd.f32 %v71, %v74
    %vm76 = vweird.f32 %v71
    %v77 = vsel %vm76, %v71, %v75
    %v78 = vmul.f32 %v70, %v77
    %v79 = vsub.f32 %v63, %v78
    %v80 = vmul.f32 %v79, %v79
    %v81 = vrot.slane %v80, 4
    %v82 = vadd.f32 %v80, %v81
    %v83 = vrot.slane %v82, 2
    %v84 = vadd.f32 %v82, %v83
    %v85 = vrot.slane %v84, 1
    %v86 = vadd.f32 %v84, %v85
    %v87 = vmul.f32 %v86, %v77
    %v88 = vadd.f32 %v87, 1e-05
    %v89 = vrsqrt.pop %v88
    %v90 = vmul.f32 %v89, %v88
    %v91 = vmul.f32 %v90, %v89
    %v92 = vmul.f32 0.5, %v91
    %v93 = vsub.f32 1.5, %v92
    %v94 = vmul.f32 %v89, %v93
    %vm95 = vweird.f32 %v88
    %vm96 = vweird.f32 %v89
    %vm97 = vmor %vm95, %vm96
    %v98 = vsel %vm97, %v89, %v94
    %v99 = vmul.f32 %v44, %v98
    %v100 = vmul.f32 %v78, %v99
    %v102 = vrot.slane %v100, 7
    %v104 = vsub.f32 %v44, %v102
    %v105 = vperm.slane %v99, 0
    %v106 = vmul.f32 %v63, %v105
    %v107 = vperm.slane %v104, 1
    %v108 = vadd.f32 %v106, %v107
    %v109 = vmul.f32 %v108, 0.01
    %v110 = vmax.f32 %v108, %v109
    %v111 = vld [vmem:[#allocation2 + $0x88] sm:$0xff]
    %v112 = vld [vmem:[#allocation2 + $0x90] sm:$0xff]
    %v113 = vld [vmem:[#allocation2 + $0x98] sm:$0xff]
    %v114 = vld [vmem:[#allocation2 + $0xa0] sm:$0xff]
    %v115 = vld [vmem:[#allocation2 + $0xa8] sm:$0xff]
    %v116 = vld [vmem:[#allocation2 + $0xb0] sm:$0xff]
    %v117 = vld [vmem:[#allocation2 + $0xb8] sm:$0xff]
    %v118 = vld [vmem:[#allocation2 + $0xc0] sm:$0xff]
    %v119 = vld [vmem:[#allocation2 + $0xc8] sm:$0xff]
    %v120 = vld [vmem:[#allocation2 + $0xd0] sm:$0xff]
    %v121 = vld [vmem:[#allocation2 + $0xd8] sm:$0xff]
    %v122 = vld [vmem:[#allocation2 + $0xe0] sm:$0xff]
    %v123 = vld [vmem:[#allocation2 + $0xe8] sm:$0xff]
    %v124 = vld [vmem:[#allocation2 + $0xf0] sm:$0xff]
    %v125 = vld [vmem:[#allocation2 + $0xf8] sm:$0xff]
    %v126 = vld [vmem:[#allocation2 + $0x100] sm:$0xff]
    %v127 = vld [vmem:[#allocation2 + $0x108] sm:$0x1]
    %v128 = vperm.slane %v127, 0
    %129 = vmatpush.msra.mxu0 %v126
    %130 = vmatpush.msra.mxu0 %v125
    %131 = vmatpush.msra.mxu0 %v124
    %132 = vmatpush.msra.mxu0 %v123
    %133 = vmatpush.msra.mxu0 %v122
    %134 = vmatpush.msra.mxu0 %v121
    %135 = vmatpush.msra.mxu0 %v120
    %136 = vmatpush.msra.mxu0 %v119
    %137 = vmatpush.msra.mxu0 %v118
    %138 = vmatpush.msra.mxu0 %v117
    %139 = vmatpush.msra.mxu0 %v116
    %140 = vmatpush.msra.mxu0 %v115
    %141 = vmatpush.msra.mxu0 %v114
    %142 = vmatpush.msra.mxu0 %v113
    %143 = vmatpush.msra.mxu0 %v112
    %144 = vmatpush.msra.mxu0 %v111
    %145 = vmatmul.f32.gmra.mxu0 %v110
    %v146 = vpop.f32.mrf.mxu0
    %v147 = vadd.f32 %v128, %v146
    %148 = vdwg.mxu0
    %149 = vst [vmem:[%s2] sm:$0xff] %v147
    // Predicated region
    $region14: #{vae_encoder_forward.1} parent=1 // pred_check
      _
    $region15: #{vae_encoder_forward.1} parent=1 // pred_check_branch
      %151 = sbr.rel (0) target = $region17
    $region16: #{vae_encoder_forward.1} parent=1 // pred_region
      _
    $region17: #{vae_encoder_forward.1} parent=1 // pred_fallthru
      _
    // Predicated region
    $region18: #{vae_encoder_forward.1} parent=1 // pred_check
      _
    $region19: #{vae_encoder_forward.1} parent=1 // pred_check_branch
      %153 = sbr.rel (0) target = $region21
    $region20: #{vae_encoder_forward.1} parent=1 // pred_region
      _
    $region21: #{vae_encoder_forward.1} parent=1 // pred_fallthru
      _
    %154 = vsyncpa [#allocation3], 1

</llo_original>
